<compile_context>
chip_gen: v7x
topology: tpu7x:2x2x1
jax: 0.10.0
libtpu: 0.0.40
codegen_flags: <defaults>
</compile_context>

<pallas_src>
import jax
import jax.numpy as jnp
from jax.experimental import pallas as pl
from jax.experimental.pallas import tpu as pltpu


def _round_up(v, m):
    return ((v + m - 1) // m) * m


def _relu(v):
    return jnp.maximum(v, 0.0)


def _vmem_capacity_bytes():
    try:
        return int(pltpu.get_tpu_info().vmem_capacity_bytes)
    except Exception:
        return 64 * 1024 * 1024  # conservative default (v7x per-TC VMEM)


# ----------------------------------------------------------------------------
# Kernels
# ----------------------------------------------------------------------------
def _make_direct_kernel(activation):
    """Single-K-block kernel: full K panel resident, no accumulator scratch."""

    def kernel(x_ref, w_ref, b_ref, o_ref):
        # x_ref: (tm, I_pad)  w_ref: (I_pad, tn)  b_ref: (1, tn)  o_ref: (tm, tn)
        y = jnp.dot(x_ref[...], w_ref[...], preferred_element_type=jnp.float32)
        y = y + b_ref[...]  # (tm, tn) + (1, tn) sublane broadcast
        o_ref[...] = activation(y).astype(o_ref.dtype)

    return kernel


def _make_ktiled_kernel(activation):
    """K-tiled kernel with an f32 VMEM accumulator (init @ k==0, flush @ last)."""

    def kernel(x_ref, w_ref, b_ref, o_ref, acc_ref):
        # x_ref: (tm, tk)  w_ref: (tk, tn)  b_ref: (1, tn)  o/acc: (tm, tn)
        k = pl.program_id(3)

        @pl.when(k == 0)
        def _():
            acc_ref[...] = jnp.zeros_like(acc_ref)

        acc_ref[...] += jnp.dot(
            x_ref[...], w_ref[...], preferred_element_type=jnp.float32
        )

        @pl.when(k == pl.num_programs(3) - 1)
        def _():
            y = acc_ref[...] + b_ref[...]
            o_ref[...] = activation(y).astype(o_ref.dtype)

    return kernel


# ----------------------------------------------------------------------------
# Wrapper
# ----------------------------------------------------------------------------
def fc_layer_forward(
    x,
    weight,
    bias,
    *,
    activation=_relu,
    use_bf16=True,          # bf16 MXU inputs + f32 accumulation (caller-visible)
    out_dtype=jnp.float32,  # set to jnp.bfloat16 to halve output HBM traffic
    vmem_budget_bytes=None,  # tile-selection budget override (testing only)
):
    """Ensembled FC layer: activation(bmm(x, weight) + bias[:, None, :])."""
    E, B, I = x.shape
    assert weight.shape[0] == E and weight.shape[1] == I
    O = weight.shape[2]
    assert bias.shape == (E, O)

    in_dtype = jnp.bfloat16 if use_bf16 else jnp.float32
    itm = jnp.dtype(in_dtype).itemsize
    out_it = jnp.dtype(out_dtype).itemsize
    sub = 16 if in_dtype == jnp.bfloat16 else 8  # sublane packing granularity

    # ---- generation-aware VMEM budget ----------------------------------------
    vmem_cap = _vmem_capacity_bytes()
    hw_budget = min((vmem_cap * 3) // 4, 96 * 1024 * 1024)  # 48 MiB v7x, 96 MiB v5e/v6e
    budget = hw_budget if vmem_budget_bytes is None else min(int(vmem_budget_bytes), hw_budget)
    vmem_limit = int(max(hw_budget, 32 * 1024 * 1024))

    # ---- lane-dense padding & tile selection ----------------------------------
    I_pad = _round_up(I, 128)
    O_pad = _round_up(O, 128)
    if O_pad > 128 and O_pad % 256 != 0:
        # Prefer tn >= 256 on the 256-wide MXUs (padded columns are zero, exact,
        # and sliced off at the end).
        O_pad = _round_up(O_pad, 256)
    tn = max(c for c in (512, 256, 128) if O_pad % c == 0)

    B_sub = _round_up(B, sub)
    if B_sub <= 512:
        tm = B_sub  # single M block, minimal padding waste
    else:
        # pick tm minimizing total batch padding, tie-break on larger tile
        tm = min((512, 256, 128), key=lambda c: (_round_up(B, c), -c))
    B_pad = _round_up(B, tm)

    def direct_need(tm_, tn_):
        # double-buffered x/w/bias blocks + double-buffered output block
        return (2 * (tm_ * I_pad + I_pad * tn_) * itm
                + 2 * tn_ * 4
                + 2 * tm_ * tn_ * out_it)

    def ktiled_need(tm_, tn_, tk_):
        return (2 * (tm_ * tk_ + tk_ * tn_) * itm
                + 2 * tn_ * 4
                + 2 * tm_ * tn_ * out_it
                + tm_ * tn_ * 4)  # accumulator scratch

    tn_cands = [c for c in (tn, 256, 128) if c <= tn and O_pad % c == 0]
    tm_cands = [c for c in (tm, 256, 128) if c <= tm and B_pad % c == 0]

    use_direct = False
    tm_d, tn_d = tm, tn
    for tn_try in tn_cands:          # keep tn wide; shrink tm first
        for tm_try in tm_cands:
            if direct_need(tm_try, tn_try) <= budget:
                use_direct, tm_d, tn_d = True, tm_try, tn_try
                break
        if use_direct:
            break

    # ---- pad operands (zero padding keeps the matmul exact) -------------------
    xp = x.astype(in_dtype)
    wp = weight.astype(in_dtype)
    bp = bias.astype(jnp.float32)
    if (B_pad, I_pad) != (B, I):
        xp = jnp.pad(xp, ((0, 0), (0, B_pad - B), (0, I_pad - I)))
    if (I_pad, O_pad) != (I, O):
        wp = jnp.pad(wp, ((0, 0), (0, I_pad - I), (0, O_pad - O)))
    if O_pad != O:
        bp = jnp.pad(bp, ((0, 0), (0, O_pad - O)))
    bp = bp.reshape(E, 1, O_pad)  # kernel sees a clean (1, tn) 2-D bias tile

    flops = 2 * E * B_pad * I_pad * O_pad
    x_bytes = B_pad * I_pad * itm
    w_bytes = I_pad * O_pad * itm

    if use_direct:
        # ------------------------- direct (K-resident) path -------------------
        tm, tn = tm_d, tn_d
        n_blocks = O_pad // tn
        m_blocks = B_pad // tm
        # Keep the larger operand hot across the innermost grid axis (its block
        # index is constant there, so Pallas skips the redundant DMAs).
        cost_m_inner = x_bytes * n_blocks + w_bytes   # grid (E, n, m)
        cost_n_inner = w_bytes * m_blocks + x_bytes   # grid (E, m, n)
        if cost_m_inner <= cost_n_inner:
            grid = (E, n_blocks, m_blocks)
            x_map = lambda e, n, m: (e, m, 0)
            w_map = lambda e, n, m: (e, 0, n)
            b_map = lambda e, n, m: (e, 0, n)
            o_map = lambda e, n, m: (e, m, n)
            rd_bytes = cost_m_inner
        else:
            grid = (E, m_blocks, n_blocks)
            x_map = lambda e, m, n: (e, m, 0)
            w_map = lambda e, m, n: (e, 0, n)
            b_map = lambda e, m, n: (e, 0, n)
            o_map = lambda e, m, n: (e, m, n)
            rd_bytes = cost_n_inner

        bytes_accessed = E * (rd_bytes + O_pad * 4 + B_pad * O_pad * out_it)
        out = pl.pallas_call(
            _make_direct_kernel(activation),
            out_shape=jax.ShapeDtypeStruct((E, B_pad, O_pad), out_dtype),
            grid_spec=pltpu.PrefetchScalarGridSpec(
                num_scalar_prefetch=0,
                grid=grid,
                in_specs=[
                    pl.BlockSpec((None, tm, I_pad), x_map),
                    pl.BlockSpec((None, I_pad, tn), w_map),
                    pl.BlockSpec((None, 1, tn), b_map),
                ],
                out_specs=pl.BlockSpec((None, tm, tn), o_map),
            ),
            compiler_params=pltpu.CompilerParams(
                dimension_semantics=("parallel", "parallel", "parallel"),
                vmem_limit_bytes=vmem_limit,
            ),
            cost_estimate=pl.CostEstimate(
                flops=flops, transcendentals=0, bytes_accessed=int(bytes_accessed)
            ),
        )(xp, wp, bp)
    else:
        # ------------------------- K-tiled fallback path ----------------------
        found = None
        for tn_try in tn_cands:              # keep tn, then tm large; shrink tk first
            for tm_try in tm_cands:
                for tk_try in (2048, 1024, 512, 256, 128):
                    if I_pad % tk_try != 0:
                        continue
                    if ktiled_need(tm_try, tn_try, tk_try) <= budget:
                        found = (tm_try, tn_try, tk_try)
                        break
                if found:
                    break
            if found:
                break
        if found is None:
            found = (tm, tn, 128)  # always fits the real HW budget

        tm, tn, tk = found
        n_blocks = O_pad // tn
        m_blocks = B_pad // tm
        k_blocks = I_pad // tk
        grid = (E, n_blocks, m_blocks, k_blocks)
        # With K tiled, x is re-read n_blocks times and weight m_blocks times.
        bytes_accessed = E * (n_blocks * x_bytes + m_blocks * w_bytes
                              + O_pad * 4 + B_pad * O_pad * out_it)
        out = pl.pallas_call(
            _make_ktiled_kernel(activation),
            out_shape=jax.ShapeDtypeStruct((E, B_pad, O_pad), out_dtype),
            grid_spec=pltpu.PrefetchScalarGridSpec(
                num_scalar_prefetch=0,
                grid=grid,
                in_specs=[
                    pl.BlockSpec((None, tm, tk), lambda e, n, m, k: (e, m, k)),
                    pl.BlockSpec((None, tk, tn), lambda e, n, m, k: (e, k, n)),
                    pl.BlockSpec((None, 1, tn), lambda e, n, m, k: (e, 0, n)),
                ],
                out_specs=pl.BlockSpec((None, tm, tn), lambda e, n, m, k: (e, m, n)),
                scratch_shapes=[pltpu.VMEM((tm, tn), jnp.float32)],
            ),
            compiler_params=pltpu.CompilerParams(
                dimension_semantics=("parallel", "parallel", "parallel", "arbitrary"),
                vmem_limit_bytes=vmem_limit,
            ),
            cost_estimate=pl.CostEstimate(
                flops=flops, transcendentals=0, bytes_accessed=int(bytes_accessed)
            ),
        )(xp, wp, bp)

    return out[:, :B, :O]


# ----------------------------------------------------------------------------
# Self-test
# ----------------------------------------------------------------------------
if __name__ == "__main__":
    key = jax.random.PRNGKey(0)

    def _check(E, B, I, O, atol, rtol, **kwargs):
        kx, kw, kb = jax.random.split(jax.random.fold_in(key, E * 1000 + B), 3)
        x = jax.random.normal(kx, (E, B, I), dtype=jnp.float32)
        # Deterministic synthetic parameters (PyTorch module leaves them uninit).
        w = jax.random.normal(kw, (E, I, O), dtype=jnp.float32) * 0.1
        b = jax.random.normal(kb, (E, O), dtype=jnp.float32) * 0.1

        out = jax.block_until_ready(fc_layer_forward(x, w, b, **kwargs))
        assert out.shape == (E, B, O)

        # Reference with the same bf16 operand rounding (kernel feeds bf16 to
        # the MXU with f32 accumulation) -> diffs are accumulation-order level.
        xb = x.astype(jnp.bfloat16).astype(jnp.float32)
        wb = w.astype(jnp.bfloat16).astype(jnp.float32)
        ref = jnp.maximum(
            jnp.einsum("ebi,eio->ebo", xb, wb, preferred_element_type=jnp.float32)
            + b[:, None, :],
            0.0,
        )
        err = float(jnp.max(jnp.abs(out - ref)))
        assert jnp.allclose(out, ref, atol=atol, rtol=rtol), err
        return x, w, b, out

    # 1) small module-like shape (direct path, grid (E,1,1))
    x, w, b, out = _check(E=4, B=8, I=32, O=32, atol=1e-4, rtol=1e-4)
    # loose check vs the pure-f32 math to confirm module semantics
    ref_f32 = jnp.maximum(jnp.einsum("ebi,eio->ebo", x, w) + b[:, None, :], 0.0)
    assert jnp.allclose(out, ref_f32, atol=5e-2, rtol=5e-2)

    # 2) odd (non-aligned) dims, tiny VMEM budget to force the K-tiled path
    _check(E=2, B=100, I=300, O=72, atol=2e-3, rtol=2e-3,
           vmem_budget_bytes=320 * 1024)

    print("KERNEL_OK")
</pallas_src>

<mosaic_0001>
module attributes {stable_mosaic.version = 11 : i64} {
  func.func @kernel(%arg0: i32, %arg1: i32, %arg2: i32, %arg3: memref<1x16x128xbf16, #tpu.memory_space<vmem>>, %arg4: memref<1x128x128xbf16, #tpu.memory_space<vmem>>, %arg5: memref<1x1x128xf32, #tpu.memory_space<vmem>>, %arg6: memref<1x16x128xf32, #tpu.memory_space<vmem>>) attributes {dimension_semantics = [#tpu.dimension_semantics<parallel>, #tpu.dimension_semantics<parallel>, #tpu.dimension_semantics<parallel>], iteration_bounds = array<i64: 4, 1, 1>, scalar_prefetch = 0 : i64, scratch_operands = 0 : i64, tpu.core_type = #tpu.core_type<tc>, window_params = [{transform_indices = @transform_0, window_bounds = array<i64: 1, 16, 128>}, {transform_indices = @transform_1, window_bounds = array<i64: 1, 128, 128>}, {transform_indices = @transform_2, window_bounds = array<i64: 1, 1, 128>}, {transform_indices = @transform_3, window_bounds = array<i64: 1, 16, 128>}]} {
    %c0 = arith.constant 0 : index
    %c0_0 = arith.constant 0 : index
    %c0_1 = arith.constant 0 : index
    %0 = vector.load %arg3[%c0, %c0_0, %c0_1] : memref<1x16x128xbf16, #tpu.memory_space<vmem>>, vector<1x16x128xbf16>
    %1 = vector.shape_cast %0 : vector<1x16x128xbf16> to vector<16x128xbf16>
    %c0_2 = arith.constant 0 : index
    %c0_3 = arith.constant 0 : index
    %c0_4 = arith.constant 0 : index
    %2 = vector.load %arg4[%c0_2, %c0_3, %c0_4] : memref<1x128x128xbf16, #tpu.memory_space<vmem>>, vector<1x128x128xbf16>
    %3 = vector.shape_cast %2 : vector<1x128x128xbf16> to vector<128x128xbf16>
    %cst = arith.constant dense<0.000000e+00> : vector<16x128xf32>
    %4 = tpu.matmul %1, %3, %cst {dimension_numbers = #tpu.dot_dimension_numbers<[1], [0], [0], [1], [0, 0, 1, 1], [], []>} : vector<16x128xbf16>, vector<128x128xbf16>, vector<16x128xf32> -> vector<16x128xf32>
    %c0_5 = arith.constant 0 : index
    %c0_6 = arith.constant 0 : index
    %c0_7 = arith.constant 0 : index
    %5 = vector.load %arg5[%c0_5, %c0_6, %c0_7] : memref<1x1x128xf32, #tpu.memory_space<vmem>>, vector<1x1x128xf32>
    %6 = vector.shape_cast %5 : vector<1x1x128xf32> to vector<1x128xf32>
    %7 = vector.broadcast %6 : vector<1x128xf32> to vector<16x128xf32>
    %8 = arith.addf %4, %7 : vector<16x128xf32>
    %cst_8 = arith.constant 0.000000e+00 : f32
    %9 = vector.broadcast %cst_8 : f32 to vector<16x128xf32>
    %10 = arith.maximumf %8, %9 : vector<16x128xf32>
    %c0_9 = arith.constant 0 : index
    %c0_10 = arith.constant 0 : index
    %c0_11 = arith.constant 0 : index
    %11 = vector.load %arg6[%c0_9, %c0_10, %c0_11] : memref<1x16x128xf32, #tpu.memory_space<vmem>>, vector<1x16x128xf32>
    %12 = vector.shape_cast %11 : vector<1x16x128xf32> to vector<16x128xf32>
    %13 = vector.shape_cast %10 : vector<16x128xf32> to vector<1x16x128xf32>
    tpu.vector_store %arg6[%c0_9, %c0_10, %c0_11], %13 {strides = array<i32>} : memref<1x16x128xf32, #tpu.memory_space<vmem>>, vector<1x16x128xf32>,
    return
  }
  func.func @transform_0(%arg0: i32, %arg1: i32, %arg2: i32) -> (i32, i32, i32) {
    %c0_i32 = arith.constant 0 : i32
    %c0_i32_0 = arith.constant 0 : i32
    return %arg0, %arg2, %c0_i32 : i32, i32, i32
  }
  func.func @transform_1(%arg0: i32, %arg1: i32, %arg2: i32) -> (i32, i32, i32) {
    %c0_i32 = arith.constant 0 : i32
    %c0_i32_0 = arith.constant 0 : i32
    return %arg0, %c0_i32, %arg1 : i32, i32, i32
  }
  func.func @transform_2(%arg0: i32, %arg1: i32, %arg2: i32) -> (i32, i32, i32) {
    %c0_i32 = arith.constant 0 : i32
    %c0_i32_0 = arith.constant 0 : i32
    return %arg0, %c0_i32, %arg1 : i32, i32, i32
  }
  func.func @transform_3(%arg0: i32, %arg1: i32, %arg2: i32) -> (i32, i32, i32) {
    %c0_i32 = arith.constant 0 : i32
    return %arg0, %arg2, %arg1 : i32, i32, i32
  }
}

</mosaic_0001>

<llo_original>
// kernel: tpu_custom_call.1
$region0: #{tpu_custom_call.1}
  #allocation0 [shape = 'u32[]', space=smem, size = 0x4, offset = 0x4, fixed_abs, tag = 'smem constant byte address 0x4 - core index']
  #allocation1 [shape = 'u32[144,128]{1,0:T(1,128)}', space=vmem, size = 0x12000, scoped, tag = 'internal scratch']
  %s0 = inlined_call_operand.hbm [shape: bf16[4,16,128], index: 0, kind: input, shape index: {}]
  %s1 = inlined_call_operand.hbm [shape: bf16[4,128,128], index: 1, kind: input, shape index: {}]
  %s2 = inlined_call_operand.vmem [shape: f32[4,1,128], index: 2, kind: input, shape index: {}]
  %s3 = inlined_call_operand.hbm [shape: f32[4,16,128], index: 3, kind: output, shape index: {}]
  %s4 = sld [smem:[#allocation0]]
  $region53: #{tpu_custom_call.1} parent=0
    _
  %s6 = ssub.s32 1, %s4
  %s7 = scalar_select 0, %s6, %s4
  $region1: #{tpu_custom_call.1} parent=0
    #allocation2 [shape = 'u8[8192]{0}', space=vmem, size = 0x2000, scoped, tag = 'input window, operand 0']
    #allocation3 [shape = 's32[2]{0}', space=sflag, size = 0x8, scoped, tag = 'scoped memory for tpu_custom_call.1']
    #allocation4 [shape = 's32[2]{0}', space=sflag, size = 0x8, scoped, tag = 'scoped memory for tpu_custom_call.1']
    #allocation5 [shape = 'u8[65536]{0}', space=vmem, size = 0x10000, scoped, tag = 'input window, operand 1']
    #allocation6 [shape = 's32[2]{0}', space=sflag, size = 0x8, scoped, tag = 'scoped memory for tpu_custom_call.1']
    #allocation7 [shape = 'u8[16384]{0}', space=vmem, size = 0x4000, scoped, tag = 'output window, operand 0']
    %8 = vsyncpa [#allocation3], 0
    %s9 = scalar_lea.sflag [#allocation3], 1
    %10 = vsyncpa %s9, 0
    %11 = vsyncpa [#allocation6], 0
    %s12 = scalar_lea.sflag [#allocation6], 1
    %13 = vsyncpa %s12, 0
    %14 = vsyncpa [#allocation4], 0
    %s15 = scalar_lea.sflag [#allocation4], 1
    %16 = vsyncpa %s15, 0
    loop: start=0, step=1, limit=6
    $region2: #{tpu_custom_call.1} parent=1 // loop_pre_header
      _
    $region3: #{tpu_custom_call.1} parent=1 // loop_header
      %s18 = sphi 0, %s22
      %p19 = scmp.ge.s32.totalorder %s18, 6
      %s25 = sphi 0, %s44
      %s26 = sphi 0, %s40
      %s27 = sphi 0, %s36
      %s28 = sphi 0, %s25
      %s29 = sphi 0, %s26
      %s30 = sphi 0, %s27
      %s31 = sphi 0, %s28
      %s32 = sphi 0, %s29
      %s33 = sphi 0, %s30
      %s49 = sphi 0, %s51
      %s52 = sphi 0, %s49
      %s53 = sphi 0, %s52
      %s69 = sphi 0, %s53
      %s77 = sphi 0, %s79
      %s80 = sphi 0, %s77
      %s81 = sphi 0, %s80
      %s97 = sphi 0, %s81
      %s105 = sphi 0, %s107
      %s108 = sphi 0, %s105
      %s109 = sphi 0, %s108
      %s125 = sphi 0, %s109
      %s135 = sphi 0, %s137
      %s138 = sphi 0, %s135
      %s139 = sphi 0, %s138
      %s155 = sphi 0, %s139
    $region4: #{tpu_custom_call.1} parent=1 // loop_header_branch
      %21 = sbr.rel (%p19) target = $region8
    $region5: #{tpu_custom_call.1} parent=1 // loop_body
      %s23 = ssub.s32 %s18, 1
      %s24 = ssub.s32 %s18, 2
      %s34 = sadd.s32 1, %s27
      %p35 = scmp.ge.s32.totalorder %s34, 1
      %s36 = scalar_select %p35, 0, %s34
      %s37 = sadd.s32 1, %s26
      %s38 = scalar_select %p35, %s37, %s26
      %p39 = scmp.ge.s32.totalorder %s38, 1
      %s40 = scalar_select %p39, 0, %s38
      %s41 = sadd.s32 1, %s25
      %s42 = scalar_select %p39, %s41, %s25
      %p43 = scmp.ge.s32.totalorder %s42, 4
      %s44 = scalar_select %p43, 0, %s42
      %s45 = ssub.s32 %s25, %s44
      %s46 = ssub.s32 %s27, %s36
      %s47 = sor.u32 %s45, %s46
      %p48 = scmp.eq.s32.totalorder %s47, 0
      %s50 = sadd.s32 %s49, 1
      %s51 = scalar_select %p48, %s49, %s50
      %p54 = pneg %p48
      %p55 = scmp.eq.s32.totalorder %s18, 3
      %p56 = por %p54, %p55
      %p57 = scmp.ne.s32.totalorder %s49, %s52
      %p58 = scmp.eq.s32.totalorder %s18, 0
      %p59 = por %p57, %p58
      %p60 = scmp.ne.s32.totalorder %s49, %s52
      %p61 = scmp.eq.s32.totalorder %s23, 3
      %p62 = por %p60, %p61
      %p63 = scmp.ne.s32.totalorder %s52, %s53
      %p64 = scmp.eq.s32.totalorder %s23, 0
      %p65 = por %p63, %p64
      %p66 = scmp.ne.s32.totalorder %s52, %s53
      %p67 = scmp.eq.s32.totalorder %s24, 3
      %p68 = por %p66, %p67
      %p70 = scmp.ne.s32.totalorder %s53, %s69
      %p71 = scmp.eq.s32.totalorder %s24, 0
      %p72 = por %p70, %p71
      %s73 = ssub.s32 %s25, %s44
      %s74 = ssub.s32 %s26, %s40
      %s75 = sor.u32 %s73, %s74
      %p76 = scmp.eq.s32.totalorder %s75, 0
      %s78 = sadd.s32 %s77, 1
      %s79 = scalar_select %p76, %s77, %s78
      %p82 = pneg %p76
      %p83 = scmp.eq.s32.totalorder %s18, 3
      %p84 = por %p82, %p83
      %p85 = scmp.ne.s32.totalorder %s77, %s80
      %p86 = scmp.eq.s32.totalorder %s18, 0
      %p87 = por %p85, %p86
      %p88 = scmp.ne.s32.totalorder %s77, %s80
      %p89 = scmp.eq.s32.totalorder %s23, 3
      %p90 = por %p88, %p89
      %p91 = scmp.ne.s32.totalorder %s80, %s81
      %p92 = scmp.eq.s32.totalorder %s23, 0
      %p93 = por %p91, %p92
      %p94 = scmp.ne.s32.totalorder %s80, %s81
      %p95 = scmp.eq.s32.totalorder %s24, 3
      %p96 = por %p94, %p95
      %p98 = scmp.ne.s32.totalorder %s81, %s97
      %p99 = scmp.eq.s32.totalorder %s24, 0
      %p100 = por %p98, %p99
      %s101 = ssub.s32 %s25, %s44
      %s102 = ssub.s32 %s26, %s40
      %s103 = sor.u32 %s101, %s102
      %p104 = scmp.eq.s32.totalorder %s103, 0
      %s106 = sadd.s32 %s105, 1
      %s107 = scalar_select %p104, %s105, %s106
      %p110 = pneg %p104
      %p111 = scmp.eq.s32.totalorder %s18, 3
      %p112 = por %p110, %p111
      %p113 = scmp.ne.s32.totalorder %s105, %s108
      %p114 = scmp.eq.s32.totalorder %s18, 0
      %p115 = por %p113, %p114
      %p116 = scmp.ne.s32.totalorder %s105, %s108
      %p117 = scmp.eq.s32.totalorder %s23, 3
      %p118 = por %p116, %p117
      %p119 = scmp.ne.s32.totalorder %s108, %s109
      %p120 = scmp.eq.s32.totalorder %s23, 0
      %p121 = por %p119, %p120
      %p122 = scmp.ne.s32.totalorder %s108, %s109
      %p123 = scmp.eq.s32.totalorder %s24, 3
      %p124 = por %p122, %p123
      %p126 = scmp.ne.s32.totalorder %s109, %s125
      %p127 = scmp.eq.s32.totalorder %s24, 0
      %p128 = por %p126, %p127
      %s129 = ssub.s32 %s25, %s44
      %s130 = ssub.s32 %s27, %s36
      %s131 = sor.u32 %s129, %s130
      %s132 = ssub.s32 %s26, %s40
      %s133 = sor.u32 %s131, %s132
      %p134 = scmp.eq.s32.totalorder %s133, 0
      %s136 = sadd.s32 %s135, 1
      %s137 = scalar_select %p134, %s135, %s136
      %p140 = pneg %p134
      %p141 = scmp.eq.s32.totalorder %s18, 3
      %p142 = por %p140, %p141
      %p143 = scmp.ne.s32.totalorder %s135, %s138
      %p144 = scmp.eq.s32.totalorder %s18, 0
      %p145 = por %p143, %p144
      %p146 = scmp.ne.s32.totalorder %s135, %s138
      %p147 = scmp.eq.s32.totalorder %s23, 3
      %p148 = por %p146, %p147
      %p149 = scmp.ne.s32.totalorder %s138, %s139
      %p150 = scmp.eq.s32.totalorder %s23, 0
      %p151 = por %p149, %p150
      %p152 = scmp.ne.s32.totalorder %s138, %s139
      %p153 = scmp.eq.s32.totalorder %s24, 3
      %p154 = por %p152, %p153
      %p156 = scmp.ne.s32.totalorder %s139, %s155
      %p157 = scmp.eq.s32.totalorder %s24, 0
      %p158 = por %p156, %p157
      %p159 = scmp.le.s32.totalorder 1, %s18
      %p160 = scmp.lt.s32.totalorder %s18, 5
      %p161 = pnand %p159, %p160
      %p162 = pneg %p161
      // Predicated region
      $region9: #{tpu_custom_call.1} parent=5 // pred_check
        _
      $region10: #{tpu_custom_call.1} parent=5 // pred_check_branch
        %164 = sbr.rel (%p161) target = $region12
      $region11: #{tpu_custom_call.1} parent=5 // pred_region
        %s165 = ssub.s32 %s18, 1
      $region12: #{tpu_custom_call.1} parent=5 // pred_fallthru
        _
      %p166 = scmp.lt.s32.totalorder %s18, 4
      // Predicated region
      $region13: #{tpu_custom_call.1} parent=5 // pred_check
        %p167 = pneg %p166
      $region14: #{tpu_custom_call.1} parent=5 // pred_check_branch
        %169 = sbr.rel (%p167) target = $region16
      $region15: #{tpu_custom_call.1} parent=5 // pred_region
        // Predicated region
        $region17: #{tpu_custom_call.1} parent=15 // pred_check
          %p170 = pneg %p59
        $region18: #{tpu_custom_call.1} parent=15 // pred_check_branch
          %172 = sbr.rel (%p170) target = $region20
        $region19: #{tpu_custom_call.1} parent=15 // pred_region
          %s173 = sand.u32 %s49, 1
          %s174 = scalar_lea.sflag [#allocation3], %s173
          %s175 = sand.u32 %s49, 1
          %s176 = smul.addr %s175, 8
          %s177 = scalar_lea.vmem [#allocation2], %s176
          %s178 = smul.u32 2, %s27
          %s180 = ssub.s32 128, 128
          %181 = vsyncadd %s174, %s180
          %s182 = smul.addr %s25, 2
          %s183 = sadd.s32 %s178, %s182
          %s184 = smul.addr %s183, 64
          %s185 = scalar_lea.hbm %s0, %s184
          %s186 = sshll.u32 %s177, 4
          %s187 = int_to_ptr.vmem [resolvable:$true] %s186
          %192 = dma.hbm_to_vmem [thread:$0]  %s185, 128, %s187, %s174, 64, 64, 4
        $region20: #{tpu_custom_call.1} parent=15 // pred_fallthru
          _
        // Predicated region
        $region21: #{tpu_custom_call.1} parent=15 // pred_check
          %p193 = pneg %p87
        $region22: #{tpu_custom_call.1} parent=15 // pred_check_branch
          %195 = sbr.rel (%p193) target = $region24
        $region23: #{tpu_custom_call.1} parent=15 // pred_region
          %s196 = sand.u32 %s77, 1
          %s197 = scalar_lea.sflag [#allocation6], %s196
          %s198 = sand.u32 %s77, 1
          %s199 = smul.addr %s198, 64
          %s200 = scalar_lea.vmem [#allocation5], %s199
          %s202 = ssub.s32 1024, 1024
          %203 = vsyncadd %s197, %s202
          %s204 = smul.addr %s25, 16
          %s205 = sadd.s32 %s26, %s204
          %s206 = smul.addr %s205, 64
          %s207 = scalar_lea.hbm %s1, %s206
          %s208 = sshll.u32 %s200, 4
          %s209 = int_to_ptr.vmem [resolvable:$true] %s208
          %214 = dma.hbm_to_vmem [thread:$0]  %s207, 1024, %s209, %s197, 64, 64, 4
        $region24: #{tpu_custom_call.1} parent=15 // pred_fallthru
          _
        // Predicated region
        $region25: #{tpu_custom_call.1} parent=15 // pred_check
          %p215 = pneg %p115
        $region26: #{tpu_custom_call.1} parent=15 // pred_check_branch
          %217 = sbr.rel (%p215) target = $region28
        $region27: #{tpu_custom_call.1} parent=15 // pred_region
          %p218 = scmp.lt.s32.totalorder %s25, 3
          %s219 = scalar_select %p218, %s25, 3
          %p220 = scmp.lt.s32.totalorder %s26, 0
          %s221 = scalar_select %p220, %s26, 0
          %s222 = sadd.s32 %s221, %s219
          %s223 = scalar_lea.vmem %s2, %s222
        $region28: #{tpu_custom_call.1} parent=15 // pred_fallthru
          _
      $region16: #{tpu_custom_call.1} parent=5 // pred_fallthru
        _
      %p224 = scmp.le.s32.totalorder 1, %s18
      %p225 = scmp.lt.s32.totalorder %s18, 5
      %p226 = pnand %p224, %p225
      %p227 = pneg %p226
      // Predicated region
      $region29: #{tpu_custom_call.1} parent=5 // pred_check
        _
      $region30: #{tpu_custom_call.1} parent=5 // pred_check_branch
        %229 = sbr.rel (%p226) target = $region32
      $region31: #{tpu_custom_call.1} parent=5 // pred_region
        %s230 = ssub.s32 %s18, 1
        %s231 = sand.u32 %s52, 1
        %s232 = scalar_lea.sflag [#allocation3], %s231
        %s233 = sand.u32 %s52, 1
        %s234 = smul.addr %s233, 8
        %s235 = scalar_lea.vmem [#allocation2], %s234
        // Predicated region
        $region33: #{tpu_custom_call.1} parent=31 // pred_check
          %p236 = pneg %p65
        $region34: #{tpu_custom_call.1} parent=31 // pred_check_branch
          %238 = sbr.rel (%p236) target = $region36
        $region35: #{tpu_custom_call.1} parent=31 // pred_region
          %239 = dma.done %s232, 128
        $region36: #{tpu_custom_call.1} parent=31 // pred_fallthru
          _
        %s240 = sand.u32 %s80, 1
        %s241 = scalar_lea.sflag [#allocation6], %s240
        %s242 = sand.u32 %s80, 1
        %s243 = smul.addr %s242, 64
        %s244 = scalar_lea.vmem [#allocation5], %s243
        // Predicated region
        $region37: #{tpu_custom_call.1} parent=31 // pred_check
          %p245 = pneg %p93
        $region38: #{tpu_custom_call.1} parent=31 // pred_check_branch
          %247 = sbr.rel (%p245) target = $region40
        $region39: #{tpu_custom_call.1} parent=31 // pred_region
          %248 = dma.done %s241, 1024
        $region40: #{tpu_custom_call.1} parent=31 // pred_fallthru
          _
        %s249 = sand.u32 %s52, 1
        %s250 = scalar_lea.sflag [#allocation3], %s249
        %s251 = sand.u32 %s52, 1
        %s252 = smul.addr %s251, 8
        %s253 = scalar_lea.vmem [#allocation2], %s252
        %p254 = pneg %p65
        %p255 = pneg %p62
        %s256 = sand.u32 %s80, 1
        %s257 = scalar_lea.sflag [#allocation6], %s256
        %s258 = sand.u32 %s80, 1
        %s259 = smul.addr %s258, 64
        %s260 = scalar_lea.vmem [#allocation5], %s259
        %p261 = pneg %p93
        %p262 = pneg %p90
        %p263 = scmp.lt.s32.totalorder %s28, 3
        %s264 = scalar_select %p263, %s28, 3
        %p265 = scmp.lt.s32.totalorder %s29, 0
        %s266 = scalar_select %p265, %s29, 0
        %s267 = sadd.s32 %s266, %s264
        %s268 = scalar_lea.vmem %s2, %s267
        %p269 = pneg %p121
        %p270 = pneg %p118
        %p271 = pneg %p151
        %p272 = pneg %p148
        %s273 = sand.u32 %s138, 1
        %s274 = scalar_lea.sflag [#allocation4], %s273
        %s275 = sand.u32 %s138, 1
        %s276 = smul.addr %s275, 16
        %s277 = scalar_lea.vmem [#allocation7], %s276
        %s278 = smul.u32 2, %s30
        %p279 = scmp.lt.s32.totalorder %s28, 3
        %s280 = scalar_select %p279, %s28, 3
        %p281 = scmp.lt.s32.totalorder %s29, 0
        %s282 = scalar_select %p281, %s29, 0
        %s283 = sadd.s32 %s282, %s280
        %s284 = scalar_lea.vmem %s2, %s283
        %s285 = smul.u32 2, %s30
        %v287 = vld [vmem:[%s235] sm:$0xf]
        %v288 = vld [vmem:[%s235 + $0x4] sm:$0xf]
        %v289 = vld [vmem:[%s244] sm:$0xf]
        %v290 = vld [vmem:[%s244 + $0x4] sm:$0xf]
        %v291 = vld [vmem:[%s244 + $0x8] sm:$0xf]
        %v292 = vld [vmem:[%s244 + $0xc] sm:$0xf]
        %v293 = vld [vmem:[%s244 + $0x10] sm:$0xf]
        %v294 = vld [vmem:[%s244 + $0x14] sm:$0xf]
        %v295 = vld [vmem:[%s244 + $0x18] sm:$0xf]
        %v296 = vld [vmem:[%s244 + $0x1c] sm:$0xf]
        %v297 = vld [vmem:[%s244 + $0x20] sm:$0xf]
        %v298 = vld [vmem:[%s244 + $0x24] sm:$0xf]
        %v299 = vld [vmem:[%s244 + $0x28] sm:$0xf]
        %v300 = vld [vmem:[%s244 + $0x2c] sm:$0xf]
        %v301 = vld [vmem:[%s244 + $0x30] sm:$0xf]
        %v302 = vld [vmem:[%s244 + $0x34] sm:$0xf]
        %v303 = vld [vmem:[%s244 + $0x38] sm:$0xf]
        %v304 = vld [vmem:[%s244 + $0x3c] sm:$0xf]
        %v305 = vld [vmem:[%s284] sm:$0x1]
        %v307 = vlaneseq
        %v308 = vshrl.u32 %v307, 7
        %v309 = vsub.s32 0, %v308
        %v310 = vrot.slane %v305, %v309
        %v314 = vunpack.c.l.b16 %v287
        %v315 = vunpack.c.l.b16 %v288
        %v316 = vpack.c.b16 %v315, %v314
        %v334 = vunpack.c.l.b16 %v289
        %v335 = vunpack.c.l.b16 %v290
        %v336 = vunpack.c.l.b16 %v291
        %v337 = vunpack.c.l.b16 %v292
        %v338 = vunpack.c.l.b16 %v293
        %v339 = vunpack.c.l.b16 %v294
        %v340 = vunpack.c.l.b16 %v295
        %v341 = vunpack.c.l.b16 %v296
        %v342 = vunpack.c.l.b16 %v297
        %v343 = vunpack.c.l.b16 %v298
        %v344 = vunpack.c.l.b16 %v299
        %v345 = vunpack.c.l.b16 %v300
        %v346 = vunpack.c.l.b16 %v301
        %v347 = vunpack.c.l.b16 %v302
        %v348 = vunpack.c.l.b16 %v303
        %v349 = vunpack.c.l.b16 %v304
        %v350 = vpack.c.b16 %v335, %v334
        %v351 = vpack.c.b16 %v337, %v336
        %v352 = vpack.c.b16 %v339, %v338
        %v353 = vpack.c.b16 %v341, %v340
        %v354 = vpack.c.b16 %v343, %v342
        %v355 = vpack.c.b16 %v345, %v344
        %v356 = vpack.c.b16 %v347, %v346
        %v357 = vpack.c.b16 %v349, %v348
        %366 = vmatprep.subr.bf16.mxu0 0
        %367 = vmatpush1.bf16.msra.mxu0 %v350
        %368 = vmatprep.subr.bf16.mxu0 0
        %369 = vmatpush1.bf16.msra.mxu0 %v351
        %370 = vmatprep.subr.bf16.mxu0 0
        %371 = vmatpush1.bf16.msra.mxu0 %v352
        %372 = vmatprep.subr.bf16.mxu0 0
        %373 = vmatpush1.bf16.msra.mxu0 %v353
        %374 = vmatprep.subr.bf16.mxu0 0
        %375 = vmatpush1.bf16.msra.mxu0 %v354
        %376 = vmatprep.subr.bf16.mxu0 0
        %377 = vmatpush1.bf16.msra.mxu0 %v355
        %378 = vmatprep.subr.bf16.mxu0 0
        %379 = vmatpush1.bf16.msra.mxu0 %v356
        %380 = vmatprep.subr.bf16.mxu0 0
        %381 = vmatpush1.bf16.msra.mxu0 %v357
        %382 = vmatprep.subr.bf16.mxu0 0
        %383 = vmatpush1.bf16.msra.mxu0 0
        %384 = vmatprep.subr.bf16.mxu0 0
        %385 = vmatpush1.bf16.msra.mxu0 0
        %386 = vmatprep.subr.bf16.mxu0 0
        %387 = vmatpush1.bf16.msra.mxu0 0
        %388 = vmatprep.subr.bf16.mxu0 0
        %389 = vmatpush1.bf16.msra.mxu0 0
        %390 = vmatprep.subr.bf16.mxu0 0
        %391 = vmatpush1.bf16.msra.mxu0 0
        %392 = vmatprep.subr.bf16.mxu0 0
        %393 = vmatpush1.bf16.msra.mxu0 0
        %394 = vmatprep.subr.bf16.mxu0 0
        %395 = vmatpush1.bf16.msra.mxu0 0
        %396 = vmatprep.subr.bf16.mxu0 0
        %397 = vmatpush1.bf16.msra.mxu0 0
        %398 = vmatprep.mubr.bf16.mxu0 0
        %399 = vmatmul.mubr.bf16.gmra.mrb[0].mxu0 %v316
        %v400 = vpop.f32.mrb[0].mxu0
        %v401 = vadd.f32 %v310, %v400
        %v402 = vpop.f32.mrb[0].mxu0
        %v403 = vpop.f32.mrb[0].mxu0
        %v404 = vadd.f32 %v310, %v403
        %v405 = vpop.f32.mrb[0].mxu0
        %406 = vdwg.mxu0
        %v407 = vmax.f32 %v401, 0.0
        %v408 = vmax.f32 %v404, 0.0
        %409 = vst [vmem:[%s277] sm:$0xff] %v407
        %410 = vst [vmem:[%s277 + $0x8] sm:$0xff] %v408
        %s411 = sand.u32 %s138, 1
        %s412 = scalar_lea.sflag [#allocation4], %s411
        %s413 = sand.u32 %s138, 1
        %s414 = smul.addr %s413, 16
        %s415 = scalar_lea.vmem [#allocation7], %s414
        // Predicated region
        $region41: #{tpu_custom_call.1} parent=31 // pred_check
          %p416 = pneg %p148
        $region42: #{tpu_custom_call.1} parent=31 // pred_check_branch
          %418 = sbr.rel (%p416) target = $region44
        $region43: #{tpu_custom_call.1} parent=31 // pred_region
          %s419 = smul.u32 2, %s30
          %s421 = ssub.s32 256, 256
          %422 = vsyncadd %s412, %s421
          %s423 = sadd.s32 %s29, %s419
          %s424 = smul.addr %s28, 2
          %s425 = sadd.s32 %s423, %s424
          %s426 = smul.addr %s425, 128
          %s427 = scalar_lea.hbm %s3, %s426
          %s428 = sshll.u32 %s415, 4
          %s429 = int_to_ptr.vmem [resolvable:$true] %s428
          %434 = dma.vmem_to_hbm [thread:$0]  %s429, 256, %s427, %s412, 128, 128, 8
        $region44: #{tpu_custom_call.1} parent=31 // pred_fallthru
          _
      $region32: #{tpu_custom_call.1} parent=5 // pred_fallthru
        _
      %p435 = scmp.le.s32.totalorder 2, %s18
      // Predicated region
      $region45: #{tpu_custom_call.1} parent=5 // pred_check
        %p436 = pneg %p435
      $region46: #{tpu_custom_call.1} parent=5 // pred_check_branch
        %438 = sbr.rel (%p436) target = $region48
      $region47: #{tpu_custom_call.1} parent=5 // pred_region
        %s439 = ssub.s32 %s18, 2
        // Predicated region
        $region49: #{tpu_custom_call.1} parent=47 // pred_check
          %p440 = pneg %p154
        $region50: #{tpu_custom_call.1} parent=47 // pred_check_branch
          %442 = sbr.rel (%p440) target = $region52
        $region51: #{tpu_custom_call.1} parent=47 // pred_region
          %s443 = sand.u32 %s139, 1
          %s444 = scalar_lea.sflag [#allocation4], %s443
          %s445 = sand.u32 %s139, 1
          %s446 = smul.addr %s445, 16
          %s447 = scalar_lea.vmem [#allocation7], %s446
          %448 = dma.done %s444, 256
        $region52: #{tpu_custom_call.1} parent=47 // pred_fallthru
          _
      $region48: #{tpu_custom_call.1} parent=5 // pred_fallthru
        _
    $region6: #{tpu_custom_call.1} parent=1 // loop_footer
      %s22 = sadd.s32 1, %s18
    $region7: #{tpu_custom_call.1} parent=1 // loop_footer_branch
      %17 = sbr.rel target = $region3
    $region8: #{tpu_custom_call.1} parent=1 // loop_exit
      _
    %449 = vsyncpa [#allocation3], 1
    %s450 = scalar_lea.sflag [#allocation3], 1
    %451 = vsyncpa %s450, 1
    %452 = vsyncpa [#allocation6], 1
    %s453 = scalar_lea.sflag [#allocation6], 1
    %454 = vsyncpa %s453, 1
    %455 = vsyncpa [#allocation4], 1
    %s456 = scalar_lea.sflag [#allocation4], 1
    %457 = vsyncpa %s456, 1

</llo_original>
